<compile_context>
chip_gen: v5e
topology: v5e:2x2
jax: 0.10.0
libtpu: 0.0.40
codegen_flags: <defaults>
</compile_context>

<pallas_src>
import functools
import math

import jax
import jax.numpy as jnp
from jax.experimental import pallas as pl
from jax.experimental.pallas import tpu as pltpu

BTILE = 8  # one sublane tile of batch rows per grid step


# ----------------------------------------------------------------------------
# Static layout of the packed weight slab and packed output slab
# ----------------------------------------------------------------------------
def _round_up(x, m):
    return (x + m - 1) // m * m


def _make_layout(D, H, OUT):
    H4, H2 = H // 4, H // 2

    # Stage-1 fused head columns: [out | s1 | r1(hidden half) | ev]
    # (ReLU region s1|r1|ev is one contiguous lane range starting at OUT.)
    heads_cols = OUT + 64 + H + H4
    s2_in = 64 + H + H4            # relu'd [s1 | r1 | ev]
    s2_out = 1 + 64 + H2           # [safety-pre | r2 | f1]
    s3_in = 64 + H2                # relu'd [r2 | f1]
    s3_out = 3 + H                 # [risk_scores | formatted_evidence]
    assert heads_cols <= 128 and s2_out <= 128 and s3_out <= 128

    lane = 128
    L = {"lane": lane, "heads_cols": heads_cols,
         "s2_in": s2_in, "s2_out": s2_out, "s3_in": s3_in, "s3_out": s3_out}

    # --- packed weight slab: 8-row-aligned sections, lane width 128 ----------
    r = 0

    def alloc(name, rows):
        nonlocal r
        L[name] = r
        r += _round_up(rows, 8)

    alloc("w_in", D)        # (D, H)
    alloc("w_rec", H)       # (H, H)
    alloc("w_heads", H)     # (H, heads_cols)            fused stage-1 heads
    alloc("w_bd2", s2_in)   # (s2_in, s2_out)            block-diag stage 2
    alloc("w_bd3", s3_in)   # (s3_in, s3_out)            block-diag stage 3
    alloc("bias", 8)        # one 8x128 block, one bias vector per row
    L["rows"] = r

    # bias rows inside the bias block
    L["b_rec"], L["b_heads"], L["b_2"], L["b_3"] = range(4)

    # fused-head column offsets
    L["c_out"] = 0
    L["c_s1"] = OUT
    L["c_r1"] = OUT + 64
    L["c_ev"] = OUT + 64 + H

    # --- packed output slab columns ------------------------------------------
    co = 0

    def ocol(name, width):
        nonlocal co
        L[name] = co
        co += width

    ocol("o_logits", OUT)
    ocol("o_conf", 1)
    ocol("o_unc", 1)
    ocol("o_safe", 1)
    ocol("o_rs", 3)
    ocol("o_rp", 3)
    ocol("o_evid", H4)
    ocol("o_hid", H)
    ocol("o_fmt", H)
    L["o_used"] = co
    L["o_lane"] = _round_up(max(co, 128), 128)
    return L


# ----------------------------------------------------------------------------
# Parameter init (PyTorch nn.Linear-style) and host-side packing
# ----------------------------------------------------------------------------
def _linear_params(key, fan_in, fan_out):
    kw, kb = jax.random.split(key)
    bound = 1.0 / math.sqrt(float(fan_in))
    w = jax.random.uniform(kw, (fan_in, fan_out), jnp.float32, -bound, bound)
    b = jax.random.uniform(kb, (1, fan_out), jnp.float32, -bound, bound)
    return w, b


def init_medical_ualnn_params(key, *, input_dim, hidden_dim, output_dim):
    H = hidden_dim
    keys = jax.random.split(key, 11)
    p = {}
    p["w_in"], p["b_rec"] = _linear_params(keys[0], input_dim, H)
    p["w_rec"], _ = _linear_params(keys[1], H, H)
    p["w_out"], p["b_out"] = _linear_params(keys[2], H, output_dim)
    p["w_ev"], p["b_ev"] = _linear_params(keys[3], H, H // 4)
    # safety gate (task='diagnostic'): Linear(H,64) -> ReLU -> Linear(64,1) -> Sigmoid
    p["w_s1"], p["b_s1"] = _linear_params(keys[4], H, 64)
    p["w_s2"], p["b_s2"] = _linear_params(keys[5], 64, 1)
    # risk assessor: Linear(2H,H) -> ReLU -> Linear(H,64) -> ReLU -> Linear(64,3)
    p["w_r1"], p["b_r1"] = _linear_params(keys[6], 2 * H, H)
    p["w_r2"], p["b_r2"] = _linear_params(keys[7], H, 64)
    p["w_r3"], p["b_r3"] = _linear_params(keys[8], 64, 3)
    # evidence formatter: Linear(H/4,H/2) -> ReLU -> Linear(H/2,H)
    p["w_f1"], p["b_f1"] = _linear_params(keys[9], H // 4, H // 2)
    p["w_f2"], p["b_f2"] = _linear_params(keys[10], H // 2, H)
    return p


def pack_medical_ualnn_params(params, *, input_dim, hidden_dim, output_dim):
    """Pack all weights/biases into one (rows, 128) f32 slab (single DMA)."""
    D, H, OUT = input_dim, hidden_dim, output_dim
    H4, H2 = H // 4, H // 2
    L = _make_layout(D, H, OUT)
    W = jnp.zeros((L["rows"], L["lane"]), jnp.float32)

    W = W.at[L["w_in"]:L["w_in"] + D, 0:H].set(params["w_in"])
    W = W.at[L["w_rec"]:L["w_rec"] + H, 0:H].set(params["w_rec"])

    # Stage-1 fused heads: [w_out | w_s1 | w_r1 (hidden half only, context=None) | w_ev]
    w_heads = jnp.concatenate(
        [params["w_out"], params["w_s1"], params["w_r1"][:H, :], params["w_ev"]],
        axis=1)
    W = W.at[L["w_heads"]:L["w_heads"] + H, 0:L["heads_cols"]].set(w_heads)

    # Stage-2 block-diagonal: diag(w_s2 (64,1), w_r2 (H,64), w_f1 (H4,H2))
    r2 = L["w_bd2"]
    W = W.at[r2 + 0:r2 + 64, 0:1].set(params["w_s2"])
    W = W.at[r2 + 64:r2 + 64 + H, 1:1 + 64].set(params["w_r2"])
    W = W.at[r2 + 64 + H:r2 + 64 + H + H4, 65:65 + H2].set(params["w_f1"])

    # Stage-3 block-diagonal: diag(w_r3 (64,3), w_f2 (H2,H))
    r3 = L["w_bd3"]
    W = W.at[r3 + 0:r3 + 64, 0:3].set(params["w_r3"])
    W = W.at[r3 + 64:r3 + 64 + H2, 3:3 + H].set(params["w_f2"])

    rb = L["bias"]
    b_heads = jnp.concatenate(
        [params["b_out"], params["b_s1"], params["b_r1"], params["b_ev"]], axis=1)[0]
    b_2 = jnp.concatenate(
        [params["b_s2"], params["b_r2"], params["b_f1"]], axis=1)[0]
    b_3 = jnp.concatenate([params["b_r3"], params["b_f2"]], axis=1)[0]
    W = W.at[rb + L["b_rec"], 0:H].set(params["b_rec"][0])
    W = W.at[rb + L["b_heads"], 0:b_heads.shape[0]].set(b_heads)
    W = W.at[rb + L["b_2"], 0:b_2.shape[0]].set(b_2)
    W = W.at[rb + L["b_3"], 0:b_3.shape[0]].set(b_3)
    return W


# ----------------------------------------------------------------------------
# Pallas kernel (one 8-row batch tile per grid step; weights VMEM-resident)
# ----------------------------------------------------------------------------
def _make_kernel(*, T, D, H, OUT, L):
    H4, H2 = H // 4, H // 2
    dt = 0.1
    inv_logC = 1.0 / math.log(float(OUT))
    rb = L["bias"]
    lane = L["lane"]
    S2IN, S2OUT = L["s2_in"], L["s2_out"]
    S3IN, S3OUT = L["s3_in"], L["s3_out"]

    def kernel(x_ref, w_ref, out_ref):
        f32 = jnp.float32

        # ---- weights: static slices of the single packed operand ------------
        w_in = w_ref[L["w_in"]:L["w_in"] + D, 0:H]
        w_rec = w_ref[L["w_rec"]:L["w_rec"] + H, 0:H]          # loop-invariant
        w_heads = w_ref[L["w_heads"]:L["w_heads"] + H, 0:lane]  # lane-dense (128)
        w_bd2 = w_ref[L["w_bd2"]:L["w_bd2"] + S2IN, 0:S2OUT]
        w_bd3 = w_ref[L["w_bd3"]:L["w_bd3"] + S3IN, 0:S3OUT]

        b_rec = w_ref[rb + L["b_rec"]:rb + L["b_rec"] + 1, 0:H]
        b_heads = w_ref[rb + L["b_heads"]:rb + L["b_heads"] + 1, 0:lane]
        b_2 = w_ref[rb + L["b_2"]:rb + L["b_2"] + 1, 0:S2OUT]
        b_3 = w_ref[rb + L["b_3"]:rb + L["b_3"] + 1, 0:S3OUT]

        # ---- UA-LNN surrogate recurrence -------------------------------------
        # x_ref is time-major within the tile: rows [t*8, (t+1)*8) = step t.
        # Input projection hoisted out of the loop: one matmul for all T steps.
        xin = jnp.dot(x_ref[...], w_in, preferred_element_type=f32) + b_rec  # (T*8, H)

        # TODO(synk): swap in exact UpdateAdaptiveLNN cell equations when available.
        # TODO(synk): explicit pltpu.matmul_push_rhs(w_rec) once / acc_lhs per
        # step (MRB accumulate on v7x) if the dump shows the RHS re-pushed.
        h = jnp.zeros((BTILE, H), f32)
        for t in range(T):                       # T static -> fully unrolled
            pre = xin[t * BTILE:(t + 1) * BTILE, :] + jnp.dot(
                h, w_rec, preferred_element_type=f32)
            gate = jax.nn.sigmoid(pre)           # adaptive update gate
            h = h + dt * gate * (jnp.tanh(pre) - h)

        # ---- stage 1: fused heads, one lane-dense H->128 matmul --------------
        heads = jnp.dot(h, w_heads, preferred_element_type=f32) + b_heads  # (8, 128)
        logits = heads[:, L["c_out"]:L["c_out"] + OUT]
        # ReLU region [s1 | r1 | ev] is one contiguous lane range:
        stage1 = jnp.maximum(heads[:, OUT:OUT + S2IN], 0.0)               # (8, 104)
        evid_raw = stage1[:, 64 + H:64 + H + H4]                          # relu(ev)

        # ---- stage 2: block-diag diag(w_s2, w_r2, w_f1) -----------------------
        s2 = jnp.dot(stage1, w_bd2, preferred_element_type=f32) + b_2      # (8, 81)
        safety = jax.nn.sigmoid(s2[:, 0:1])                                # (8, 1)
        stage2 = jnp.maximum(s2[:, 1:1 + S3IN], 0.0)                       # (8, 80)

        # ---- stage 3: block-diag diag(w_r3, w_f2) -----------------------------
        s3 = jnp.dot(stage2, w_bd3, preferred_element_type=f32) + b_3      # (8, 35)
        risk_scores = s3[:, 0:3]
        fmt = s3[:, 3:3 + H]

        # ---- output softmax -> confidence / normalized-entropy uncertainty ----
        # Exact normalization: confidence feeds a hard safety threshold.
        m = jnp.max(logits, axis=-1, keepdims=True)
        e = jnp.exp(logits - m)
        probs = e / jnp.sum(e, axis=-1, keepdims=True)
        conf = jnp.max(probs, axis=-1, keepdims=True)
        unc = -jnp.sum(probs * jnp.log(probs + 1e-9), axis=-1, keepdims=True) * inv_logC
        unc = jnp.clip(unc, 0.0, 1.0)

        # ---- risk softmax (exact) ---------------------------------------------
        rm = jnp.max(risk_scores, axis=-1, keepdims=True)
        re = jnp.exp(risk_scores - rm)
        risk_probs = re / jnp.sum(re, axis=-1, keepdims=True)

        # ---- packed output: zero pad once, then direct sub-range stores --------
        out_ref[...] = jnp.zeros_like(out_ref)
        out_ref[:, L["o_logits"]:L["o_logits"] + OUT] = logits
        out_ref[:, L["o_conf"]:L["o_conf"] + 1] = conf
        out_ref[:, L["o_unc"]:L["o_unc"] + 1] = unc
        out_ref[:, L["o_safe"]:L["o_safe"] + 1] = safety
        out_ref[:, L["o_rs"]:L["o_rs"] + 3] = risk_scores
        out_ref[:, L["o_rp"]:L["o_rp"] + 3] = risk_probs
        out_ref[:, L["o_evid"]:L["o_evid"] + H4] = evid_raw
        out_ref[:, L["o_hid"]:L["o_hid"] + H] = h
        out_ref[:, L["o_fmt"]:L["o_fmt"] + H] = fmt

    return kernel


@functools.partial(
    jax.jit, static_argnames=("input_dim", "hidden_dim", "output_dim", "seq_len"))
def _run_kernel(xT, w_packed, *, input_dim, hidden_dim, output_dim, seq_len):
    T = seq_len
    TB, D = xT.shape
    NB = TB // (T * BTILE)                        # number of 8-row batch tiles
    L = _make_layout(input_dim, hidden_dim, output_dim)
    kernel = _make_kernel(T=T, D=D, H=hidden_dim, OUT=output_dim, L=L)
    return pl.pallas_call(
        kernel,
        out_shape=jax.ShapeDtypeStruct((NB * BTILE, L["o_lane"]), jnp.float32),
        grid_spec=pltpu.PrefetchScalarGridSpec(
            num_scalar_prefetch=0,
            grid=(NB,),
            in_specs=[
                # one (T*8, D) time-major batch tile per grid step
                pl.BlockSpec((T * BTILE, D), lambda b: (b, 0)),
                # constant block index -> weight slab DMA'd once, VMEM-resident
                pl.BlockSpec((L["rows"], L["lane"]), lambda b: (0, 0)),
            ],
            out_specs=pl.BlockSpec((BTILE, L["o_lane"]), lambda b: (b, 0)),
        ),
        compiler_params=pltpu.CompilerParams(
            dimension_semantics=("parallel",)),
        # Working set < 1 MiB: no vmem_limit override (v7x-safe).
    )(xT, w_packed)


# ----------------------------------------------------------------------------
# High-level forward (matches MedicalUALNN.forward with context=None, eval mode)
# ----------------------------------------------------------------------------
def medical_ualnn_forward(x, packed_w, *, input_dim, hidden_dim, output_dim,
                          safety_threshold=0.95, task="diagnostic",
                          require_explanation=True):
    B, T, D = x.shape
    H, H4, OUT = hidden_dim, hidden_dim // 4, output_dim

    # Pad batch to full 8-sublane tiles; lay out each tile time-major so every
    # recurrence step reads one aligned 8-row block of the input projection.
    BP = _round_up(B, BTILE)
    NB = BP // BTILE
    x_pad = jnp.zeros((BP, T, D), x.dtype).at[:B].set(x)
    xT = (x_pad.reshape(NB, BTILE, T, D)
               .transpose(0, 2, 1, 3)            # (NB, T, 8, D)
               .reshape(NB * T * BTILE, D))

    out = _run_kernel(xT, packed_w, input_dim=input_dim, hidden_dim=hidden_dim,
                      output_dim=output_dim, seq_len=T)

    L = _make_layout(input_dim, hidden_dim, output_dim)
    o = out[:B]
    logits = o[:, L["o_logits"]:L["o_logits"] + OUT]
    conf = o[:, L["o_conf"]]
    unc = o[:, L["o_unc"]]
    safety = o[:, L["o_safe"]:L["o_safe"] + 1]
    risk_scores = o[:, L["o_rs"]:L["o_rs"] + 3]
    risk_probs = o[:, L["o_rp"]:L["o_rp"] + 3]
    evid_raw = o[:, L["o_evid"]:L["o_evid"] + H4]
    hidden = o[:, L["o_hid"]:L["o_hid"] + H]
    fmt_evid = o[:, L["o_fmt"]:L["o_fmt"] + H]

    safe_prediction = (conf >= safety_threshold) & (safety[:, 0] >= 0.9)

    results = {
        "prediction": logits,
        "confidence": conf,
        "uncertainty": unc,
        "safety_score": safety,
        "safe_prediction": safe_prediction,
        "risk_assessment": {
            "scores": risk_scores,
            "probabilities": risk_probs,
            # Device array; no host sync in the hot path (reference uses batch-0).
            "risk_level_idx": jnp.argmax(risk_probs[0], axis=-1),
        },
        "evidence": fmt_evid,
        "requires_review": ~safe_prediction,
        "task": task,
        "hidden_features": hidden,
    }
    if require_explanation:
        evidence_importance = jnp.mean(jnp.abs(evid_raw), axis=0)
        _, top_idx = jax.lax.top_k(evidence_importance, min(5, H4))
        results["explanation"] = {
            # Device-array means; string labels derived lazily off the hot path.
            "confidence_mean": jnp.mean(conf),
            "uncertainty_mean": jnp.mean(unc),
            "primary_factors": top_idx,
            "risk_factors": risk_probs,
            "task_specific": task,
        }
    return results


def finalize_labels(results):
    """Host-side (blocking) string labels; call AFTER block_until_ready."""
    labels = {}
    labels["risk_level"] = ["low", "medium", "high"][
        int(results["risk_assessment"]["risk_level_idx"])]
    if "explanation" in results:
        labels["confidence_level"] = (
            "high" if float(results["explanation"]["confidence_mean"]) > 0.9
            else "moderate")
        labels["uncertainty_level"] = (
            "low" if float(results["explanation"]["uncertainty_mean"]) < 0.2
            else "moderate")
    return labels


# ----------------------------------------------------------------------------
# Main
# ----------------------------------------------------------------------------
if __name__ == "__main__":
    B, T, D_IN, HIDDEN, OUT = 2, 8, 16, 32, 8

    key = jax.random.PRNGKey(0)
    k_x, k_p = jax.random.split(key)
    x = jax.random.normal(k_x, (B, T, D_IN), jnp.float32)

    params = init_medical_ualnn_params(
        k_p, input_dim=D_IN, hidden_dim=HIDDEN, output_dim=OUT)
    w_packed = pack_medical_ualnn_params(
        params, input_dim=D_IN, hidden_dim=HIDDEN, output_dim=OUT)

    results = medical_ualnn_forward(
        x, w_packed, input_dim=D_IN, hidden_dim=HIDDEN, output_dim=OUT)

    jax.block_until_ready(results["prediction"])
    jax.block_until_ready(results["evidence"])
    jax.block_until_ready(results["risk_assessment"]["probabilities"])

    assert results["prediction"].shape == (B, OUT)
    assert results["confidence"].shape == (B,)
    assert results["safety_score"].shape == (B, 1)
    assert results["risk_assessment"]["scores"].shape == (B, 3)
    assert results["evidence"].shape == (B, HIDDEN)
    assert results["hidden_features"].shape == (B, HIDDEN)
    # risk softmax sanity (exact normalization now)
    s = float(jnp.sum(results["risk_assessment"]["probabilities"][0]))
    assert abs(s - 1.0) < 1e-4
    u = float(results["uncertainty"][0])
    assert 0.0 <= u <= 1.0
    _ = finalize_labels(results)   # host-side strings, off the hot path

    print("KERNEL_OK")
</pallas_src>

<mosaic_0001>
module attributes {stable_mosaic.version = 11 : i64} {
  func.func @kernel(%arg0: i32, %arg1: memref<64x16xf32, #tpu.memory_space<vmem>>, %arg2: memref<272x128xf32, #tpu.memory_space<vmem>>, %arg3: memref<8x128xf32, #tpu.memory_space<vmem>>) attributes {dimension_semantics = [#tpu.dimension_semantics<parallel>], iteration_bounds = array<i64: 1>, scalar_prefetch = 0 : i64, scratch_operands = 0 : i64, tpu.core_type = #tpu.core_type<tc>, window_params = [{transform_indices = @transform_0, window_bounds = array<i64: 64, 16>}, {pipeline_mode = #tpu.pipeline_mode<synchronous>, transform_indices = @transform_1, window_bounds = array<i64: 272, 128>}, {transform_indices = @transform_2, window_bounds = array<i64: 8, 128>}]} {
    %c0 = arith.constant 0 : index
    %c0_0 = arith.constant 0 : index
    %0 = vector.load %arg2[%c0, %c0_0] : memref<272x128xf32, #tpu.memory_space<vmem>>, vector<16x32xf32>
    %c16 = arith.constant 16 : index
    %c0_1 = arith.constant 0 : index
    %1 = vector.load %arg2[%c16, %c0_1] : memref<272x128xf32, #tpu.memory_space<vmem>>, vector<32x32xf32>
    %c48 = arith.constant 48 : index
    %c0_2 = arith.constant 0 : index
    %2 = vector.load %arg2[%c48, %c0_2] : memref<272x128xf32, #tpu.memory_space<vmem>>, vector<32x128xf32>
    %c80 = arith.constant 80 : index
    %c0_3 = arith.constant 0 : index
    %3 = vector.load %arg2[%c80, %c0_3] : memref<272x128xf32, #tpu.memory_space<vmem>>, vector<104x81xf32>
    %c184 = arith.constant 184 : index
    %c0_4 = arith.constant 0 : index
    %4 = vector.load %arg2[%c184, %c0_4] : memref<272x128xf32, #tpu.memory_space<vmem>>, vector<80x35xf32>
    %c264 = arith.constant 264 : index
    %c0_5 = arith.constant 0 : index
    %5 = vector.load %arg2[%c264, %c0_5] : memref<272x128xf32, #tpu.memory_space<vmem>>, vector<1x32xf32>
    %c265 = arith.constant 265 : index
    %c0_6 = arith.constant 0 : index
    %6 = vector.load %arg2[%c265, %c0_6] : memref<272x128xf32, #tpu.memory_space<vmem>>, vector<1x128xf32>
    %c266 = arith.constant 266 : index
    %c0_7 = arith.constant 0 : index
    %7 = vector.load %arg2[%c266, %c0_7] : memref<272x128xf32, #tpu.memory_space<vmem>>, vector<1x81xf32>
    %c267 = arith.constant 267 : index
    %c0_8 = arith.constant 0 : index
    %8 = vector.load %arg2[%c267, %c0_8] : memref<272x128xf32, #tpu.memory_space<vmem>>, vector<1x35xf32>
    %c0_9 = arith.constant 0 : index
    %c0_10 = arith.constant 0 : index
    %9 = vector.load %arg1[%c0_9, %c0_10] : memref<64x16xf32, #tpu.memory_space<vmem>>, vector<64x16xf32>
    %cst = arith.constant dense<0.000000e+00> : vector<64x32xf32>
    %10 = tpu.matmul %9, %0, %cst {dimension_numbers = #tpu.dot_dimension_numbers<[1], [0], [0], [1], [0, 0, 1, 1], [], []>} : vector<64x16xf32>, vector<16x32xf32>, vector<64x32xf32> -> vector<64x32xf32>
    %11 = vector.broadcast %5 : vector<1x32xf32> to vector<64x32xf32>
    %12 = arith.addf %10, %11 : vector<64x32xf32>
    %cst_11 = arith.constant 0.000000e+00 : f32
    %13 = vector.broadcast %cst_11 : f32 to vector<8x32xf32>
    %14 = vector.extract_strided_slice %12 {offsets = [0, 0], sizes = [8, 32], strides = [1, 1]} : vector<64x32xf32> to vector<8x32xf32>
    %cst_12 = arith.constant dense<0.000000e+00> : vector<8x32xf32>
    %15 = tpu.matmul %13, %1, %cst_12 {dimension_numbers = #tpu.dot_dimension_numbers<[1], [0], [0], [1], [0, 0, 1, 1], [], []>} : vector<8x32xf32>, vector<32x32xf32>, vector<8x32xf32> -> vector<8x32xf32>
    %16 = arith.addf %14, %15 : vector<8x32xf32>
    %17 = arith.negf %16 : vector<8x32xf32>
    %18 = math.exp %17 : vector<8x32xf32>
    %cst_13 = arith.constant 1.000000e+00 : f32
    %19 = vector.broadcast %cst_13 : f32 to vector<8x32xf32>
    %20 = arith.addf %19, %18 : vector<8x32xf32>
    %21 = arith.divf %19, %20 : vector<8x32xf32>
    %cst_14 = arith.constant 1.000000e-01 : f32
    %22 = vector.broadcast %cst_14 : f32 to vector<8x32xf32>
    %23 = arith.mulf %22, %21 : vector<8x32xf32>
    %24 = math.tanh %16 : vector<8x32xf32>
    %25 = arith.subf %24, %13 : vector<8x32xf32>
    %26 = arith.mulf %23, %25 : vector<8x32xf32>
    %27 = arith.addf %13, %26 : vector<8x32xf32>
    %28 = vector.extract_strided_slice %12 {offsets = [8, 0], sizes = [8, 32], strides = [1, 1]} : vector<64x32xf32> to vector<8x32xf32>
    %cst_15 = arith.constant dense<0.000000e+00> : vector<8x32xf32>
    %29 = tpu.matmul %27, %1, %cst_15 {dimension_numbers = #tpu.dot_dimension_numbers<[1], [0], [0], [1], [0, 0, 1, 1], [], []>} : vector<8x32xf32>, vector<32x32xf32>, vector<8x32xf32> -> vector<8x32xf32>
    %30 = arith.addf %28, %29 : vector<8x32xf32>
    %31 = arith.negf %30 : vector<8x32xf32>
    %32 = math.exp %31 : vector<8x32xf32>
    %cst_16 = arith.constant 1.000000e+00 : f32
    %33 = vector.broadcast %cst_16 : f32 to vector<8x32xf32>
    %34 = arith.addf %33, %32 : vector<8x32xf32>
    %35 = arith.divf %33, %34 : vector<8x32xf32>
    %cst_17 = arith.constant 1.000000e-01 : f32
    %36 = vector.broadcast %cst_17 : f32 to vector<8x32xf32>
    %37 = arith.mulf %36, %35 : vector<8x32xf32>
    %38 = math.tanh %30 : vector<8x32xf32>
    %39 = arith.subf %38, %27 : vector<8x32xf32>
    %40 = arith.mulf %37, %39 : vector<8x32xf32>
    %41 = arith.addf %27, %40 : vector<8x32xf32>
    %42 = vector.extract_strided_slice %12 {offsets = [16, 0], sizes = [8, 32], strides = [1, 1]} : vector<64x32xf32> to vector<8x32xf32>
    %cst_18 = arith.constant dense<0.000000e+00> : vector<8x32xf32>
    %43 = tpu.matmul %41, %1, %cst_18 {dimension_numbers = #tpu.dot_dimension_numbers<[1], [0], [0], [1], [0, 0, 1, 1], [], []>} : vector<8x32xf32>, vector<32x32xf32>, vector<8x32xf32> -> vector<8x32xf32>
    %44 = arith.addf %42, %43 : vector<8x32xf32>
    %45 = arith.negf %44 : vector<8x32xf32>
    %46 = math.exp %45 : vector<8x32xf32>
    %cst_19 = arith.constant 1.000000e+00 : f32
    %47 = vector.broadcast %cst_19 : f32 to vector<8x32xf32>
    %48 = arith.addf %47, %46 : vector<8x32xf32>
    %49 = arith.divf %47, %48 : vector<8x32xf32>
    %cst_20 = arith.constant 1.000000e-01 : f32
    %50 = vector.broadcast %cst_20 : f32 to vector<8x32xf32>
    %51 = arith.mulf %50, %49 : vector<8x32xf32>
    %52 = math.tanh %44 : vector<8x32xf32>
    %53 = arith.subf %52, %41 : vector<8x32xf32>
    %54 = arith.mulf %51, %53 : vector<8x32xf32>
    %55 = arith.addf %41, %54 : vector<8x32xf32>
    %56 = vector.extract_strided_slice %12 {offsets = [24, 0], sizes = [8, 32], strides = [1, 1]} : vector<64x32xf32> to vector<8x32xf32>
    %cst_21 = arith.constant dense<0.000000e+00> : vector<8x32xf32>
    %57 = tpu.matmul %55, %1, %cst_21 {dimension_numbers = #tpu.dot_dimension_numbers<[1], [0], [0], [1], [0, 0, 1, 1], [], []>} : vector<8x32xf32>, vector<32x32xf32>, vector<8x32xf32> -> vector<8x32xf32>
    %58 = arith.addf %56, %57 : vector<8x32xf32>
    %59 = arith.negf %58 : vector<8x32xf32>
    %60 = math.exp %59 : vector<8x32xf32>
    %cst_22 = arith.constant 1.000000e+00 : f32
    %61 = vector.broadcast %cst_22 : f32 to vector<8x32xf32>
    %62 = arith.addf %61, %60 : vector<8x32xf32>
    %63 = arith.divf %61, %62 : vector<8x32xf32>
    %cst_23 = arith.constant 1.000000e-01 : f32
    %64 = vector.broadcast %cst_23 : f32 to vector<8x32xf32>
    %65 = arith.mulf %64, %63 : vector<8x32xf32>
    %66 = math.tanh %58 : vector<8x32xf32>
    %67 = arith.subf %66, %55 : vector<8x32xf32>
    %68 = arith.mulf %65, %67 : vector<8x32xf32>
    %69 = arith.addf %55, %68 : vector<8x32xf32>
    %70 = vector.extract_strided_slice %12 {offsets = [32, 0], sizes = [8, 32], strides = [1, 1]} : vector<64x32xf32> to vector<8x32xf32>
    %cst_24 = arith.constant dense<0.000000e+00> : vector<8x32xf32>
    %71 = tpu.matmul %69, %1, %cst_24 {dimension_numbers = #tpu.dot_dimension_numbers<[1], [0], [0], [1], [0, 0, 1, 1], [], []>} : vector<8x32xf32>, vector<32x32xf32>, vector<8x32xf32> -> vector<8x32xf32>
    %72 = arith.addf %70, %71 : vector<8x32xf32>
    %73 = arith.negf %72 : vector<8x32xf32>
    %74 = math.exp %73 : vector<8x32xf32>
    %cst_25 = arith.constant 1.000000e+00 : f32
    %75 = vector.broadcast %cst_25 : f32 to vector<8x32xf32>
    %76 = arith.addf %75, %74 : vector<8x32xf32>
    %77 = arith.divf %75, %76 : vector<8x32xf32>
    %cst_26 = arith.constant 1.000000e-01 : f32
    %78 = vector.broadcast %cst_26 : f32 to vector<8x32xf32>
    %79 = arith.mulf %78, %77 : vector<8x32xf32>
    %80 = math.tanh %72 : vector<8x32xf32>
    %81 = arith.subf %80, %69 : vector<8x32xf32>
    %82 = arith.mulf %79, %81 : vector<8x32xf32>
    %83 = arith.addf %69, %82 : vector<8x32xf32>
    %84 = vector.extract_strided_slice %12 {offsets = [40, 0], sizes = [8, 32], strides = [1, 1]} : vector<64x32xf32> to vector<8x32xf32>
    %cst_27 = arith.constant dense<0.000000e+00> : vector<8x32xf32>
    %85 = tpu.matmul %83, %1, %cst_27 {dimension_numbers = #tpu.dot_dimension_numbers<[1], [0], [0], [1], [0, 0, 1, 1], [], []>} : vector<8x32xf32>, vector<32x32xf32>, vector<8x32xf32> -> vector<8x32xf32>
    %86 = arith.addf %84, %85 : vector<8x32xf32>
    %87 = arith.negf %86 : vector<8x32xf32>
    %88 = math.exp %87 : vector<8x32xf32>
    %cst_28 = arith.constant 1.000000e+00 : f32
    %89 = vector.broadcast %cst_28 : f32 to vector<8x32xf32>
    %90 = arith.addf %89, %88 : vector<8x32xf32>
    %91 = arith.divf %89, %90 : vector<8x32xf32>
    %cst_29 = arith.constant 1.000000e-01 : f32
    %92 = vector.broadcast %cst_29 : f32 to vector<8x32xf32>
    %93 = arith.mulf %92, %91 : vector<8x32xf32>
    %94 = math.tanh %86 : vector<8x32xf32>
    %95 = arith.subf %94, %83 : vector<8x32xf32>
    %96 = arith.mulf %93, %95 : vector<8x32xf32>
    %97 = arith.addf %83, %96 : vector<8x32xf32>
    %98 = vector.extract_strided_slice %12 {offsets = [48, 0], sizes = [8, 32], strides = [1, 1]} : vector<64x32xf32> to vector<8x32xf32>
    %cst_30 = arith.constant dense<0.000000e+00> : vector<8x32xf32>
    %99 = tpu.matmul %97, %1, %cst_30 {dimension_numbers = #tpu.dot_dimension_numbers<[1], [0], [0], [1], [0, 0, 1, 1], [], []>} : vector<8x32xf32>, vector<32x32xf32>, vector<8x32xf32> -> vector<8x32xf32>
    %100 = arith.addf %98, %99 : vector<8x32xf32>
    %101 = arith.negf %100 : vector<8x32xf32>
    %102 = math.exp %101 : vector<8x32xf32>
    %cst_31 = arith.constant 1.000000e+00 : f32
    %103 = vector.broadcast %cst_31 : f32 to vector<8x32xf32>
    %104 = arith.addf %103, %102 : vector<8x32xf32>
    %105 = arith.divf %103, %104 : vector<8x32xf32>
    %cst_32 = arith.constant 1.000000e-01 : f32
    %106 = vector.broadcast %cst_32 : f32 to vector<8x32xf32>
    %107 = arith.mulf %106, %105 : vector<8x32xf32>
    %108 = math.tanh %100 : vector<8x32xf32>
    %109 = arith.subf %108, %97 : vector<8x32xf32>
    %110 = arith.mulf %107, %109 : vector<8x32xf32>
    %111 = arith.addf %97, %110 : vector<8x32xf32>
    %112 = vector.extract_strided_slice %12 {offsets = [56, 0], sizes = [8, 32], strides = [1, 1]} : vector<64x32xf32> to vector<8x32xf32>
    %cst_33 = arith.constant dense<0.000000e+00> : vector<8x32xf32>
    %113 = tpu.matmul %111, %1, %cst_33 {dimension_numbers = #tpu.dot_dimension_numbers<[1], [0], [0], [1], [0, 0, 1, 1], [], []>} : vector<8x32xf32>, vector<32x32xf32>, vector<8x32xf32> -> vector<8x32xf32>
    %114 = arith.addf %112, %113 : vector<8x32xf32>
    %115 = arith.negf %114 : vector<8x32xf32>
    %116 = math.exp %115 : vector<8x32xf32>
    %cst_34 = arith.constant 1.000000e+00 : f32
    %117 = vector.broadcast %cst_34 : f32 to vector<8x32xf32>
    %118 = arith.addf %117, %116 : vector<8x32xf32>
    %119 = arith.divf %117, %118 : vector<8x32xf32>
    %cst_35 = arith.constant 1.000000e-01 : f32
    %120 = vector.broadcast %cst_35 : f32 to vector<8x32xf32>
    %121 = arith.mulf %120, %119 : vector<8x32xf32>
    %122 = math.tanh %114 : vector<8x32xf32>
    %123 = arith.subf %122, %111 : vector<8x32xf32>
    %124 = arith.mulf %121, %123 : vector<8x32xf32>
    %125 = arith.addf %111, %124 : vector<8x32xf32>
    %cst_36 = arith.constant dense<0.000000e+00> : vector<8x128xf32>
    %126 = tpu.matmul %125, %2, %cst_36 {dimension_numbers = #tpu.dot_dimension_numbers<[1], [0], [0], [1], [0, 0, 1, 1], [], []>} : vector<8x32xf32>, vector<32x128xf32>, vector<8x128xf32> -> vector<8x128xf32>
    %127 = vector.broadcast %6 : vector<1x128xf32> to vector<8x128xf32>
    %128 = arith.addf %126, %127 : vector<8x128xf32>
    %129 = vector.extract_strided_slice %128 {offsets = [0, 0], sizes = [8, 8], strides = [1, 1]} : vector<8x128xf32> to vector<8x8xf32>
    %130 = vector.extract_strided_slice %128 {offsets = [0, 8], sizes = [8, 104], strides = [1, 1]} : vector<8x128xf32> to vector<8x104xf32>
    %cst_37 = arith.constant 0.000000e+00 : f32
    %131 = vector.broadcast %cst_37 : f32 to vector<8x104xf32>
    %132 = arith.maximumf %130, %131 : vector<8x104xf32>
    %133 = vector.extract_strided_slice %132 {offsets = [0, 96], sizes = [8, 8], strides = [1, 1]} : vector<8x104xf32> to vector<8x8xf32>
    %cst_38 = arith.constant dense<0.000000e+00> : vector<8x81xf32>
    %134 = tpu.matmul %132, %3, %cst_38 {dimension_numbers = #tpu.dot_dimension_numbers<[1], [0], [0], [1], [0, 0, 1, 1], [], []>} : vector<8x104xf32>, vector<104x81xf32>, vector<8x81xf32> -> vector<8x81xf32>
    %135 = vector.broadcast %7 : vector<1x81xf32> to vector<8x81xf32>
    %136 = arith.addf %134, %135 : vector<8x81xf32>
    %137 = vector.extract_strided_slice %136 {offsets = [0, 0], sizes = [8, 1], strides = [1, 1]} : vector<8x81xf32> to vector<8x1xf32>
    %138 = arith.negf %137 : vector<8x1xf32>
    %139 = math.exp %138 : vector<8x1xf32>
    %cst_39 = arith.constant 1.000000e+00 : f32
    %140 = vector.broadcast %cst_39 : f32 to vector<8x1xf32>
    %141 = arith.addf %140, %139 : vector<8x1xf32>
    %142 = arith.divf %140, %141 : vector<8x1xf32>
    %143 = vector.extract_strided_slice %136 {offsets = [0, 1], sizes = [8, 80], strides = [1, 1]} : vector<8x81xf32> to vector<8x80xf32>
    %cst_40 = arith.constant 0.000000e+00 : f32
    %144 = vector.broadcast %cst_40 : f32 to vector<8x80xf32>
    %145 = arith.maximumf %143, %144 : vector<8x80xf32>
    %cst_41 = arith.constant dense<0.000000e+00> : vector<8x35xf32>
    %146 = tpu.matmul %145, %4, %cst_41 {dimension_numbers = #tpu.dot_dimension_numbers<[1], [0], [0], [1], [0, 0, 1, 1], [], []>} : vector<8x80xf32>, vector<80x35xf32>, vector<8x35xf32> -> vector<8x35xf32>
    %147 = vector.broadcast %8 : vector<1x35xf32> to vector<8x35xf32>
    %148 = arith.addf %146, %147 : vector<8x35xf32>
    %149 = vector.extract_strided_slice %148 {offsets = [0, 0], sizes = [8, 3], strides = [1, 1]} : vector<8x35xf32> to vector<8x3xf32>
    %150 = vector.extract_strided_slice %148 {offsets = [0, 3], sizes = [8, 32], strides = [1, 1]} : vector<8x35xf32> to vector<8x32xf32>
    %cst_42 = arith.constant dense<0xFF800000> : vector<8xf32>
    %151 = vector.multi_reduction <maximumf>, %129, %cst_42 [1] : vector<8x8xf32> to vector<8xf32>
    %152 = vector.shape_cast %151 : vector<8xf32> to vector<8x1xf32>
    %153 = vector.broadcast %152 : vector<8x1xf32> to vector<8x8xf32>
    %154 = arith.subf %129, %153 : vector<8x8xf32>
    %155 = math.exp %154 : vector<8x8xf32>
    %cst_43 = arith.constant dense<0.000000e+00> : vector<8xf32>
    %156 = vector.multi_reduction <add>, %155, %cst_43 [1] : vector<8x8xf32> to vector<8xf32>
    %157 = vector.shape_cast %156 : vector<8xf32> to vector<8x1xf32>
    %158 = vector.broadcast %157 : vector<8x1xf32> to vector<8x8xf32>
    %159 = arith.divf %155, %158 : vector<8x8xf32>
    %cst_44 = arith.constant dense<0xFF800000> : vector<8xf32>
    %160 = vector.multi_reduction <maximumf>, %159, %cst_44 [1] : vector<8x8xf32> to vector<8xf32>
    %161 = vector.shape_cast %160 : vector<8xf32> to vector<8x1xf32>
    %cst_45 = arith.constant 9.99999971E-10 : f32
    %162 = vector.broadcast %cst_45 : f32 to vector<8x8xf32>
    %163 = arith.addf %159, %162 : vector<8x8xf32>
    %164 = math.log %163 : vector<8x8xf32>
    %165 = arith.mulf %159, %164 : vector<8x8xf32>
    %cst_46 = arith.constant dense<0.000000e+00> : vector<8xf32>
    %166 = vector.multi_reduction <add>, %165, %cst_46 [1] : vector<8x8xf32> to vector<8xf32>
    %167 = vector.shape_cast %166 : vector<8xf32> to vector<8x1xf32>
    %cst_47 = arith.constant 0.000000e+00 : f32
    %168 = vector.broadcast %cst_47 : f32 to vector<8x1xf32>
    %169 = arith.subf %168, %167 : vector<8x1xf32>
    %cst_48 = arith.constant 0.48089835 : f32
    %170 = vector.broadcast %cst_48 : f32 to vector<8x1xf32>
    %171 = arith.mulf %169, %170 : vector<8x1xf32>
    %cst_49 = arith.constant 0.000000e+00 : f32
    %cst_50 = arith.constant 1.000000e+00 : f32
    %172 = vector.broadcast %cst_49 : f32 to vector<8x1xf32>
    %173 = arith.maximumf %172, %171 : vector<8x1xf32>
    %174 = vector.broadcast %cst_50 : f32 to vector<8x1xf32>
    %175 = arith.minimumf %174, %173 : vector<8x1xf32>
    %cst_51 = arith.constant dense<0xFF800000> : vector<8xf32>
    %176 = vector.multi_reduction <maximumf>, %149, %cst_51 [1] : vector<8x3xf32> to vector<8xf32>
    %177 = vector.shape_cast %176 : vector<8xf32> to vector<8x1xf32>
    %178 = vector.broadcast %177 : vector<8x1xf32> to vector<8x3xf32>
    %179 = arith.subf %149, %178 : vector<8x3xf32>
    %180 = math.exp %179 : vector<8x3xf32>
    %cst_52 = arith.constant dense<0.000000e+00> : vector<8xf32>
    %181 = vector.multi_reduction <add>, %180, %cst_52 [1] : vector<8x3xf32> to vector<8xf32>
    %182 = vector.shape_cast %181 : vector<8xf32> to vector<8x1xf32>
    %183 = vector.broadcast %182 : vector<8x1xf32> to vector<8x3xf32>
    %184 = arith.divf %180, %183 : vector<8x3xf32>
    %cst_53 = arith.constant 0.000000e+00 : f32
    %185 = vector.broadcast %cst_53 : f32 to vector<8x128xf32>
    %c0_54 = arith.constant 0 : index
    %c0_55 = arith.constant 0 : index
    %186 = vector.load %arg3[%c0_54, %c0_55] : memref<8x128xf32, #tpu.memory_space<vmem>>, vector<8x128xf32>
    tpu.vector_store %arg3[%c0_54, %c0_55], %185 {strides = array<i32>} : memref<8x128xf32, #tpu.memory_space<vmem>>, vector<8x128xf32>,
    %c0_56 = arith.constant 0 : index
    %c0_57 = arith.constant 0 : index
    %187 = vector.load %arg3[%c0_56, %c0_57] : memref<8x128xf32, #tpu.memory_space<vmem>>, vector<8x8xf32>
    tpu.vector_store %arg3[%c0_56, %c0_57], %129 {strides = array<i32>} : memref<8x128xf32, #tpu.memory_space<vmem>>, vector<8x8xf32>,
    %c0_58 = arith.constant 0 : index
    %c8 = arith.constant 8 : index
    %188 = vector.load %arg3[%c0_58, %c8] : memref<8x128xf32, #tpu.memory_space<vmem>>, vector<8x1xf32>
    tpu.vector_store %arg3[%c0_58, %c8], %161 {strides = array<i32>} : memref<8x128xf32, #tpu.memory_space<vmem>>, vector<8x1xf32>,
    %c0_59 = arith.constant 0 : index
    %c9 = arith.constant 9 : index
    %189 = vector.load %arg3[%c0_59, %c9] : memref<8x128xf32, #tpu.memory_space<vmem>>, vector<8x1xf32>
    tpu.vector_store %arg3[%c0_59, %c9], %175 {strides = array<i32>} : memref<8x128xf32, #tpu.memory_space<vmem>>, vector<8x1xf32>,
    %c0_60 = arith.constant 0 : index
    %c10 = arith.constant 10 : index
    %190 = vector.load %arg3[%c0_60, %c10] : memref<8x128xf32, #tpu.memory_space<vmem>>, vector<8x1xf32>
    tpu.vector_store %arg3[%c0_60, %c10], %142 {strides = array<i32>} : memref<8x128xf32, #tpu.memory_space<vmem>>, vector<8x1xf32>,
    %c0_61 = arith.constant 0 : index
    %c11 = arith.constant 11 : index
    %191 = vector.load %arg3[%c0_61, %c11] : memref<8x128xf32, #tpu.memory_space<vmem>>, vector<8x3xf32>
    tpu.vector_store %arg3[%c0_61, %c11], %149 {strides = array<i32>} : memref<8x128xf32, #tpu.memory_space<vmem>>, vector<8x3xf32>,
    %c0_62 = arith.constant 0 : index
    %c14 = arith.constant 14 : index
    %192 = vector.load %arg3[%c0_62, %c14] : memref<8x128xf32, #tpu.memory_space<vmem>>, vector<8x3xf32>
    tpu.vector_store %arg3[%c0_62, %c14], %184 {strides = array<i32>} : memref<8x128xf32, #tpu.memory_space<vmem>>, vector<8x3xf32>,
    %c0_63 = arith.constant 0 : index
    %c17 = arith.constant 17 : index
    %193 = vector.load %arg3[%c0_63, %c17] : memref<8x128xf32, #tpu.memory_space<vmem>>, vector<8x8xf32>
    tpu.vector_store %arg3[%c0_63, %c17], %133 {strides = array<i32>} : memref<8x128xf32, #tpu.memory_space<vmem>>, vector<8x8xf32>,
    %c0_64 = arith.constant 0 : index
    %c25 = arith.constant 25 : index
    %194 = vector.load %arg3[%c0_64, %c25] : memref<8x128xf32, #tpu.memory_space<vmem>>, vector<8x32xf32>
    tpu.vector_store %arg3[%c0_64, %c25], %125 {strides = array<i32>} : memref<8x128xf32, #tpu.memory_space<vmem>>, vector<8x32xf32>,
    %c0_65 = arith.constant 0 : index
    %c57 = arith.constant 57 : index
    %195 = vector.load %arg3[%c0_65, %c57] : memref<8x128xf32, #tpu.memory_space<vmem>>, vector<8x32xf32>
    tpu.vector_store %arg3[%c0_65, %c57], %150 {strides = array<i32>} : memref<8x128xf32, #tpu.memory_space<vmem>>, vector<8x32xf32>,
    return
  }
  func.func @transform_0(%arg0: i32) -> (i32, i32) {
    %c0_i32 = arith.constant 0 : i32
    %c0_i32_0 = arith.constant 0 : i32
    return %arg0, %c0_i32 : i32, i32
  }
  func.func @transform_1(%arg0: i32) -> (i32, i32) {
    %c0_i32 = arith.constant 0 : i32
    %c0_i32_0 = arith.constant 0 : i32
    %c0_i32_1 = arith.constant 0 : i32
    return %c0_i32, %c0_i32_0 : i32, i32
  }
  func.func @transform_2(%arg0: i32) -> (i32, i32) {
    %c0_i32 = arith.constant 0 : i32
    %c0_i32_0 = arith.constant 0 : i32
    return %arg0, %c0_i32 : i32, i32
  }
}

</mosaic_0001>

<llo_original>
// kernel: _run_kernel.1
$region0: #{_run_kernel.1}
  #allocation0 [shape = 'u32[]', space=smem, size = 0x4, offset = 0x4, fixed_abs, tag = 'smem constant byte address 0x4 - core index']
  #allocation1 [shape = 'u32[72,128]{1,0:T(1,128)}', space=vmem, size = 0x9000, scoped, tag = 'internal scratch']
  %s0 = inlined_call_operand.vmem [shape: f32[64,16], index: 0, kind: input, shape index: {}]
  %s1 = inlined_call_operand.hbm [shape: f32[272,128], index: 1, kind: input, shape index: {}]
  %s2 = inlined_call_operand.hbm [shape: f32[8,128], index: 2, kind: output, shape index: {}]
  %s3 = sld [smem:[#allocation0]]
  $region22: #{_run_kernel.1} parent=0
    _
  %s5 = ssub.s32 1, %s3
  %s6 = scalar_select 0, %s5, %s3
  $region1: #{_run_kernel.1} parent=0
    #allocation2 [shape = 'u8[139264]{0}', space=vmem, size = 0x22000, scoped, tag = 'input window, operand 1, single buffered']
    #allocation3 [shape = 's32[1]{0}', space=sflag, size = 0x4, scoped, tag = 'scoped memory for _run_kernel.1']
    #allocation4 [shape = 's32[1]{0}', space=sflag, size = 0x4, scoped, tag = 'scoped memory for _run_kernel.1']
    #allocation5 [shape = 'u8[4096]{0}', space=vmem, size = 0x1000, scoped, tag = 'output window, operand 0, single buffered']
    %7 = vsyncpa [#allocation3], 0
    %8 = vsyncpa [#allocation4], 0
    // Predicated region
    $region2: #{_run_kernel.1} parent=1 // pred_check
      _
    $region3: #{_run_kernel.1} parent=1 // pred_check_branch
      %10 = sbr.rel (0) target = $region5
    $region4: #{_run_kernel.1} parent=1 // pred_region
      _
    $region5: #{_run_kernel.1} parent=1 // pred_fallthru
      _
    // Predicated region
    $region6: #{_run_kernel.1} parent=1 // pred_check
      _
    $region7: #{_run_kernel.1} parent=1 // pred_check_branch
      %12 = sbr.rel (0) target = $region9
    $region8: #{_run_kernel.1} parent=1 // pred_region
      %14 = vsyncadd [#allocation3], 0
      %s15 = sshll.u32 %s1, 4
      %s16 = int_to_ptr.hbm [resolvable:$true] %s15
      %s17 = sshll.u32 [#allocation2], 4
      %s18 = int_to_ptr.vmem [resolvable:$true] %s17
      %23 = dma.hbm_to_vmem [thread:$0]  %s16, 4352, %s18, [#allocation3], 128, 128, 8
    $region9: #{_run_kernel.1} parent=1 // pred_fallthru
      _
    // Predicated region
    $region10: #{_run_kernel.1} parent=1 // pred_check
      _
    $region11: #{_run_kernel.1} parent=1 // pred_check_branch
      %25 = sbr.rel (0) target = $region13
    $region12: #{_run_kernel.1} parent=1 // pred_region
      %27 = dma.done [#allocation3], 4352
    $region13: #{_run_kernel.1} parent=1 // pred_fallthru
      _
    %v28 = vld [vmem:[#allocation2] sm:$0xff]
    %v29 = vld [vmem:[#allocation2 + $0x8] sm:$0xff]
    %v30 = vld [vmem:[#allocation2 + $0x10] sm:$0xff]
    %v31 = vld [vmem:[#allocation2 + $0x18] sm:$0xff]
    %v32 = vld [vmem:[#allocation2 + $0x20] sm:$0xff]
    %v33 = vld [vmem:[#allocation2 + $0x28] sm:$0xff]
    %v34 = vld [vmem:[#allocation2 + $0x30] sm:$0xff]
    %v35 = vld [vmem:[#allocation2 + $0x38] sm:$0xff]
    %v36 = vld [vmem:[#allocation2 + $0x40] sm:$0xff]
    %v37 = vld [vmem:[#allocation2 + $0x48] sm:$0xff]
    %v38 = vld [vmem:[#allocation2 + $0x50] sm:$0xff]
    %v39 = vld [vmem:[#allocation2 + $0x58] sm:$0xff]
    %v40 = vld [vmem:[#allocation2 + $0x60] sm:$0xff]
    %v41 = vld [vmem:[#allocation2 + $0x68] sm:$0xff]
    %v42 = vld [vmem:[#allocation2 + $0x70] sm:$0xff]
    %v43 = vld [vmem:[#allocation2 + $0x78] sm:$0xff]
    %v44 = vld [vmem:[#allocation2 + $0x80] sm:$0xff]
    %v45 = vld [vmem:[#allocation2 + $0x88] sm:$0xff]
    %v46 = vld [vmem:[#allocation2 + $0x90] sm:$0xff]
    %v47 = vld [vmem:[#allocation2 + $0x98] sm:$0xff]
    %v48 = vld [vmem:[#allocation2 + $0xa0] sm:$0xff]
    %v49 = vld [vmem:[#allocation2 + $0xa8] sm:$0xff]
    %v50 = vld [vmem:[#allocation2 + $0xb0] sm:$0xff]
    %v51 = vld [vmem:[#allocation2 + $0xb8] sm:$0xff]
    %v52 = vld [vmem:[#allocation2 + $0xc0] sm:$0xff]
    %v53 = vld [vmem:[#allocation2 + $0xc8] sm:$0xff]
    %v54 = vld [vmem:[#allocation2 + $0xd0] sm:$0xff]
    %v55 = vld [vmem:[#allocation2 + $0xd8] sm:$0xff]
    %v56 = vld [vmem:[#allocation2 + $0xe0] sm:$0xff]
    %v57 = vld [vmem:[#allocation2 + $0xe8] sm:$0xff]
    %v58 = vld [vmem:[#allocation2 + $0xf0] sm:$0xff]
    %v59 = vld [vmem:[#allocation2 + $0xf8] sm:$0xff]
    %v60 = vld [vmem:[#allocation2 + $0x100] sm:$0xff]
    %v61 = vld [vmem:[#allocation2 + $0x108] sm:$0x1]
    %v62 = vld [vmem:[#allocation2 + $0x109] sm:$0x1]
    %v63 = vld [vmem:[#allocation2 + $0x10a] sm:$0x1]
    %v64 = vld [vmem:[#allocation2 + $0x10b] sm:$0x1]
    %v65 = vld [vmem:[%s0] sm:$0xff]
    %v66 = vld [vmem:[%s0 + $0x8] sm:$0xff]
    %v67 = vld [vmem:[%s0 + $0x10] sm:$0xff]
    %v68 = vld [vmem:[%s0 + $0x18] sm:$0xff]
    %v69 = vld [vmem:[%s0 + $0x20] sm:$0xff]
    %v70 = vld [vmem:[%s0 + $0x28] sm:$0xff]
    %v71 = vld [vmem:[%s0 + $0x30] sm:$0xff]
    %v72 = vld [vmem:[%s0 + $0x38] sm:$0xff]
    %v73 = vperm.slane %v61, 0
    %vm74 = vcmask 130048
    %v76 = vsel %vm74, %v65, 0
    %v79 = vsel %vm74, %v66, 0
    %v82 = vsel %vm74, %v67, 0
    %v85 = vsel %vm74, %v68, 0
    %v88 = vsel %vm74, %v69, 0
    %v91 = vsel %vm74, %v70, 0
    %v94 = vsel %vm74, %v71, 0
    %v97 = vsel %vm74, %v72, 0
    %99 = vmatpush.msra.mxu0 0.0
    %100 = vmatpush.msra.mxu0 0.0
    %101 = vmatpush.msra.mxu0 0.0
    %102 = vmatpush.msra.mxu0 0.0
    %103 = vmatpush.msra.mxu0 0.0
    %104 = vmatpush.msra.mxu0 0.0
    %105 = vmatpush.msra.mxu0 0.0
    %106 = vmatpush.msra.mxu0 0.0
    %107 = vmatpush.msra.mxu0 0.0
    %108 = vmatpush.msra.mxu0 0.0
    %109 = vmatpush.msra.mxu0 0.0
    %110 = vmatpush.msra.mxu0 0.0
    %111 = vmatpush.msra.mxu0 0.0
    %112 = vmatpush.msra.mxu0 0.0
    %113 = vmatpush.msra.mxu0 %v29
    %114 = vmatpush.msra.mxu0 %v28
    %115 = vmatmul.f32.gmra.mxu0 %v76
    %v116 = vpop.f32.mrf.mxu0
    %v117 = vadd.f32 %v73, %v116
    %118 = vmatmul.f32.gmra.mxu0 %v79
    %v119 = vpop.f32.mrf.mxu0
    %v120 = vadd.f32 %v73, %v119
    %121 = vmatmul.f32.gmra.mxu0 %v82
    %v122 = vpop.f32.mrf.mxu0
    %v123 = vadd.f32 %v73, %v122
    %124 = vmatmul.f32.gmra.mxu0 %v85
    %v125 = vpop.f32.mrf.mxu0
    %v126 = vadd.f32 %v73, %v125
    %127 = vmatmul.f32.gmra.mxu0 %v88
    %v128 = vpop.f32.mrf.mxu0
    %v129 = vadd.f32 %v73, %v128
    %130 = vmatmul.f32.gmra.mxu0 %v91
    %v131 = vpop.f32.mrf.mxu0
    %v132 = vadd.f32 %v73, %v131
    %133 = vmatmul.f32.gmra.mxu0 %v94
    %v134 = vpop.f32.mrf.mxu0
    %v135 = vadd.f32 %v73, %v134
    %136 = vmatmul.f32.gmra.mxu0 %v97
    %v137 = vpop.f32.mrf.mxu0
    %v138 = vadd.f32 %v73, %v137
    %139 = vdwg.mxu0
    %vm140 = vcmask 261120
    %v142 = vsel %vm140, 0.0, 0
    %144 = vmatpush.msra.mxu0 0.0
    %145 = vmatpush.msra.mxu0 0.0
    %146 = vmatpush.msra.mxu0 0.0
    %147 = vmatpush.msra.mxu0 0.0
    %148 = vmatpush.msra.mxu0 0.0
    %149 = vmatpush.msra.mxu0 0.0
    %150 = vmatpush.msra.mxu0 0.0
    %151 = vmatpush.msra.mxu0 0.0
    %152 = vmatpush.msra.mxu0 0.0
    %153 = vmatpush.msra.mxu0 0.0
    %154 = vmatpush.msra.mxu0 0.0
    %155 = vmatpush.msra.mxu0 0.0
    %156 = vmatpush.msra.mxu0 %v33
    %157 = vmatpush.msra.mxu0 %v32
    %158 = vmatpush.msra.mxu0 %v31
    %159 = vmatpush.msra.mxu0 %v30
    %160 = vmatmul.f32.gmra.mxu0 %v142
    %v161 = vpop.f32.mrf.mxu0
    %v162 = vadd.f32 0.0, %v161
    %163 = vdwg.mxu0
    %v164 = vadd.f32 %v117, %v162
    %v165 = vxor.u32 %v164, 2147483648
    %v166 = vmul.f32 %v165, 1.442695
    %v167 = vpow.pop %v166
    %v168 = vadd.f32 %v167, 1.0
    %v169 = vrcp.pop %v168
    %v170 = vmul.f32 %v168, %v169
    %v171 = vsub.f32 1.0, %v170
    %v172 = vmul.f32 %v169, %v171
    %v173 = vadd.f32 %v169, %v172
    %vm174 = vweird.f32 %v168
    %vm175 = vweird.f32 %v169
    %vm176 = vmor %vm174, %vm175
    %v177 = vsel %vm176, %v169, %v173
    %v178 = vand.u32 2147483647, %v168
    %vm179 = vcmp.eq.f32.partialorder %v178, 8.507059e+37
    %v180 = vand.u32 %v168, 2147483648
    %v181 = vor.u32 1.1754944e-38, %v180
    %v182 = vsel %vm179, %v181, %v177
    %v183 = vmul.f32 1.0, %v182
    %v184 = vmul.f32 %v183, 0.1
    %v185 = vtanh.pop %v164
    %v186 = vmul.f32 %v184, %v185
    %v187 = vadd.f32 %v186, 0.0
    %v189 = vsel %vm140, %v187, 0
    %191 = vmatpush.msra.mxu0 0.0
    %192 = vmatpush.msra.mxu0 0.0
    %193 = vmatpush.msra.mxu0 0.0
    %194 = vmatpush.msra.mxu0 0.0
    %195 = vmatpush.msra.mxu0 0.0
    %196 = vmatpush.msra.mxu0 0.0
    %197 = vmatpush.msra.mxu0 0.0
    %198 = vmatpush.msra.mxu0 0.0
    %199 = vmatpush.msra.mxu0 0.0
    %200 = vmatpush.msra.mxu0 0.0
    %201 = vmatpush.msra.mxu0 0.0
    %202 = vmatpush.msra.mxu0 0.0
    %203 = vmatpush.msra.mxu0 %v33
    %204 = vmatpush.msra.mxu0 %v32
    %205 = vmatpush.msra.mxu0 %v31
    %206 = vmatpush.msra.mxu0 %v30
    %207 = vmatmul.f32.gmra.mxu0 %v189
    %v208 = vpop.f32.mrf.mxu0
    %v209 = vadd.f32 0.0, %v208
    %210 = vdwg.mxu0
    %v211 = vadd.f32 %v120, %v209
    %v212 = vxor.u32 %v211, 2147483648
    %v213 = vmul.f32 %v212, 1.442695
    %v214 = vpow.pop %v213
    %v215 = vadd.f32 %v214, 1.0
    %v216 = vrcp.pop %v215
    %v217 = vmul.f32 %v215, %v216
    %v218 = vsub.f32 1.0, %v217
    %v219 = vmul.f32 %v216, %v218
    %v220 = vadd.f32 %v216, %v219
    %vm221 = vweird.f32 %v215
    %vm222 = vweird.f32 %v216
    %vm223 = vmor %vm221, %vm222
    %v224 = vsel %vm223, %v216, %v220
    %v225 = vand.u32 2147483647, %v215
    %vm226 = vcmp.eq.f32.partialorder %v225, 8.507059e+37
    %v227 = vand.u32 %v215, 2147483648
    %v228 = vor.u32 1.1754944e-38, %v227
    %v229 = vsel %vm226, %v228, %v224
    %v230 = vmul.f32 1.0, %v229
    %v231 = vmul.f32 %v230, 0.1
    %v232 = vtanh.pop %v211
    %v233 = vsub.f32 %v232, %v187
    %v234 = vmul.f32 %v231, %v233
    %v235 = vadd.f32 %v187, %v234
    %v237 = vsel %vm140, %v235, 0
    %239 = vmatpush.msra.mxu0 0.0
    %240 = vmatpush.msra.mxu0 0.0
    %241 = vmatpush.msra.mxu0 0.0
    %242 = vmatpush.msra.mxu0 0.0
    %243 = vmatpush.msra.mxu0 0.0
    %244 = vmatpush.msra.mxu0 0.0
    %245 = vmatpush.msra.mxu0 0.0
    %246 = vmatpush.msra.mxu0 0.0
    %247 = vmatpush.msra.mxu0 0.0
    %248 = vmatpush.msra.mxu0 0.0
    %249 = vmatpush.msra.mxu0 0.0
    %250 = vmatpush.msra.mxu0 0.0
    %251 = vmatpush.msra.mxu0 %v33
    %252 = vmatpush.msra.mxu0 %v32
    %253 = vmatpush.msra.mxu0 %v31
    %254 = vmatpush.msra.mxu0 %v30
    %255 = vmatmul.f32.gmra.mxu0 %v237
    %v256 = vpop.f32.mrf.mxu0
    %v257 = vadd.f32 0.0, %v256
    %258 = vdwg.mxu0
    %v259 = vadd.f32 %v123, %v257
    %v260 = vxor.u32 %v259, 2147483648
    %v261 = vmul.f32 %v260, 1.442695
    %v262 = vpow.pop %v261
    %v263 = vadd.f32 %v262, 1.0
    %v264 = vrcp.pop %v263
    %v265 = vmul.f32 %v263, %v264
    %v266 = vsub.f32 1.0, %v265
    %v267 = vmul.f32 %v264, %v266
    %v268 = vadd.f32 %v264, %v267
    %vm269 = vweird.f32 %v263
    %vm270 = vweird.f32 %v264
    %vm271 = vmor %vm269, %vm270
    %v272 = vsel %vm271, %v264, %v268
    %v273 = vand.u32 2147483647, %v263
    %vm274 = vcmp.eq.f32.partialorder %v273, 8.507059e+37
    %v275 = vand.u32 %v263, 2147483648
    %v276 = vor.u32 1.1754944e-38, %v275
    %v277 = vsel %vm274, %v276, %v272
    %v278 = vmul.f32 1.0, %v277
    %v279 = vmul.f32 %v278, 0.1
    %v280 = vtanh.pop %v259
    %v281 = vsub.f32 %v280, %v235
    %v282 = vmul.f32 %v279, %v281
    %v283 = vadd.f32 %v235, %v282
    %v285 = vsel %vm140, %v283, 0
    %287 = vmatpush.msra.mxu0 0.0
    %288 = vmatpush.msra.mxu0 0.0
    %289 = vmatpush.msra.mxu0 0.0
    %290 = vmatpush.msra.mxu0 0.0
    %291 = vmatpush.msra.mxu0 0.0
    %292 = vmatpush.msra.mxu0 0.0
    %293 = vmatpush.msra.mxu0 0.0
    %294 = vmatpush.msra.mxu0 0.0
    %295 = vmatpush.msra.mxu0 0.0
    %296 = vmatpush.msra.mxu0 0.0
    %297 = vmatpush.msra.mxu0 0.0
    %298 = vmatpush.msra.mxu0 0.0
    %299 = vmatpush.msra.mxu0 %v33
    %300 = vmatpush.msra.mxu0 %v32
    %301 = vmatpush.msra.mxu0 %v31
    %302 = vmatpush.msra.mxu0 %v30
    %303 = vmatmul.f32.gmra.mxu0 %v285
    %v304 = vpop.f32.mrf.mxu0
    %v305 = vadd.f32 0.0, %v304
    %306 = vdwg.mxu0
    %v307 = vadd.f32 %v126, %v305
    %v308 = vxor.u32 %v307, 2147483648
    %v309 = vmul.f32 %v308, 1.442695
    %v310 = vpow.pop %v309
    %v311 = vadd.f32 %v310, 1.0
    %v312 = vrcp.pop %v311
    %v313 = vmul.f32 %v311, %v312
    %v314 = vsub.f32 1.0, %v313
    %v315 = vmul.f32 %v312, %v314
    %v316 = vadd.f32 %v312, %v315
    %vm317 = vweird.f32 %v311
    %vm318 = vweird.f32 %v312
    %vm319 = vmor %vm317, %vm318
    %v320 = vsel %vm319, %v312, %v316
    %v321 = vand.u32 2147483647, %v311
    %vm322 = vcmp.eq.f32.partialorder %v321, 8.507059e+37
    %v323 = vand.u32 %v311, 2147483648
    %v324 = vor.u32 1.1754944e-38, %v323
    %v325 = vsel %vm322, %v324, %v320
    %v326 = vmul.f32 1.0, %v325
    %v327 = vmul.f32 %v326, 0.1
    %v328 = vtanh.pop %v307
    %v329 = vsub.f32 %v328, %v283
    %v330 = vmul.f32 %v327, %v329
    %v331 = vadd.f32 %v283, %v330
    %v333 = vsel %vm140, %v331, 0
    %335 = vmatpush.msra.mxu0 0.0
    %336 = vmatpush.msra.mxu0 0.0
    %337 = vmatpush.msra.mxu0 0.0
    %338 = vmatpush.msra.mxu0 0.0
    %339 = vmatpush.msra.mxu0 0.0
    %340 = vmatpush.msra.mxu0 0.0
    %341 = vmatpush.msra.mxu0 0.0
    %342 = vmatpush.msra.mxu0 0.0
    %343 = vmatpush.msra.mxu0 0.0
    %344 = vmatpush.msra.mxu0 0.0
    %345 = vmatpush.msra.mxu0 0.0
    %346 = vmatpush.msra.mxu0 0.0
    %347 = vmatpush.msra.mxu0 %v33
    %348 = vmatpush.msra.mxu0 %v32
    %349 = vmatpush.msra.mxu0 %v31
    %350 = vmatpush.msra.mxu0 %v30
    %351 = vmatmul.f32.gmra.mxu0 %v333
    %v352 = vpop.f32.mrf.mxu0
    %v353 = vadd.f32 0.0, %v352
    %354 = vdwg.mxu0
    %v355 = vadd.f32 %v129, %v353
    %v356 = vxor.u32 %v355, 2147483648
    %v357 = vmul.f32 %v356, 1.442695
    %v358 = vpow.pop %v357
    %v359 = vadd.f32 %v358, 1.0
    %v360 = vrcp.pop %v359
    %v361 = vmul.f32 %v359, %v360
    %v362 = vsub.f32 1.0, %v361
    %v363 = vmul.f32 %v360, %v362
    %v364 = vadd.f32 %v360, %v363
    %vm365 = vweird.f32 %v359
    %vm366 = vweird.f32 %v360
    %vm367 = vmor %vm365, %vm366
    %v368 = vsel %vm367, %v360, %v364
    %v369 = vand.u32 2147483647, %v359
    %vm370 = vcmp.eq.f32.partialorder %v369, 8.507059e+37
    %v371 = vand.u32 %v359, 2147483648
    %v372 = vor.u32 1.1754944e-38, %v371
    %v373 = vsel %vm370, %v372, %v368
    %v374 = vmul.f32 1.0, %v373
    %v375 = vmul.f32 %v374, 0.1
    %v376 = vtanh.pop %v355
    %v377 = vsub.f32 %v376, %v331
    %v378 = vmul.f32 %v375, %v377
    %v379 = vadd.f32 %v331, %v378
    %v381 = vsel %vm140, %v379, 0
    %383 = vmatpush.msra.mxu0 0.0
    %384 = vmatpush.msra.mxu0 0.0
    %385 = vmatpush.msra.mxu0 0.0
    %386 = vmatpush.msra.mxu0 0.0
    %387 = vmatpush.msra.mxu0 0.0
    %388 = vmatpush.msra.mxu0 0.0
    %389 = vmatpush.msra.mxu0 0.0
    %390 = vmatpush.msra.mxu0 0.0
    %391 = vmatpush.msra.mxu0 0.0
    %392 = vmatpush.msra.mxu0 0.0
    %393 = vmatpush.msra.mxu0 0.0
    %394 = vmatpush.msra.mxu0 0.0
    %395 = vmatpush.msra.mxu0 %v33
    %396 = vmatpush.msra.mxu0 %v32
    %397 = vmatpush.msra.mxu0 %v31
    %398 = vmatpush.msra.mxu0 %v30
    %399 = vmatmul.f32.gmra.mxu0 %v381
    %v400 = vpop.f32.mrf.mxu0
    %v401 = vadd.f32 0.0, %v400
    %402 = vdwg.mxu0
    %v403 = vadd.f32 %v132, %v401
    %v404 = vxor.u32 %v403, 2147483648
    %v405 = vmul.f32 %v404, 1.442695
    %v406 = vpow.pop %v405
    %v407 = vadd.f32 %v406, 1.0
    %v408 = vrcp.pop %v407
    %v409 = vmul.f32 %v407, %v408
    %v410 = vsub.f32 1.0, %v409
    %v411 = vmul.f32 %v408, %v410
    %v412 = vadd.f32 %v408, %v411
    %vm413 = vweird.f32 %v407
    %vm414 = vweird.f32 %v408
    %vm415 = vmor %vm413, %vm414
    %v416 = vsel %vm415, %v408, %v412
    %v417 = vand.u32 2147483647, %v407
    %vm418 = vcmp.eq.f32.partialorder %v417, 8.507059e+37
    %v419 = vand.u32 %v407, 2147483648
    %v420 = vor.u32 1.1754944e-38, %v419
    %v421 = vsel %vm418, %v420, %v416
    %v422 = vmul.f32 1.0, %v421
    %v423 = vmul.f32 %v422, 0.1
    %v424 = vtanh.pop %v403
    %v425 = vsub.f32 %v424, %v379
    %v426 = vmul.f32 %v423, %v425
    %v427 = vadd.f32 %v379, %v426
    %v429 = vsel %vm140, %v427, 0
    %431 = vmatpush.msra.mxu0 0.0
    %432 = vmatpush.msra.mxu0 0.0
    %433 = vmatpush.msra.mxu0 0.0
    %434 = vmatpush.msra.mxu0 0.0
    %435 = vmatpush.msra.mxu0 0.0
    %436 = vmatpush.msra.mxu0 0.0
    %437 = vmatpush.msra.mxu0 0.0
    %438 = vmatpush.msra.mxu0 0.0
    %439 = vmatpush.msra.mxu0 0.0
    %440 = vmatpush.msra.mxu0 0.0
    %441 = vmatpush.msra.mxu0 0.0
    %442 = vmatpush.msra.mxu0 0.0
    %443 = vmatpush.msra.mxu0 %v33
    %444 = vmatpush.msra.mxu0 %v32
    %445 = vmatpush.msra.mxu0 %v31
    %446 = vmatpush.msra.mxu0 %v30
    %447 = vmatmul.f32.gmra.mxu0 %v429
    %v448 = vpop.f32.mrf.mxu0
    %v449 = vadd.f32 0.0, %v448
    %450 = vdwg.mxu0
    %v451 = vadd.f32 %v135, %v449
    %v452 = vxor.u32 %v451, 2147483648
    %v453 = vmul.f32 %v452, 1.442695
    %v454 = vpow.pop %v453
    %v455 = vadd.f32 %v454, 1.0
    %v456 = vrcp.pop %v455
    %v457 = vmul.f32 %v455, %v456
    %v458 = vsub.f32 1.0, %v457
    %v459 = vmul.f32 %v456, %v458
    %v460 = vadd.f32 %v456, %v459
    %vm461 = vweird.f32 %v455
    %vm462 = vweird.f32 %v456
    %vm463 = vmor %vm461, %vm462
    %v464 = vsel %vm463, %v456, %v460
    %v465 = vand.u32 2147483647, %v455
    %vm466 = vcmp.eq.f32.partialorder %v465, 8.507059e+37
    %v467 = vand.u32 %v455, 2147483648
    %v468 = vor.u32 1.1754944e-38, %v467
    %v469 = vsel %vm466, %v468, %v464
    %v470 = vmul.f32 1.0, %v469
    %v471 = vmul.f32 %v470, 0.1
    %v472 = vtanh.pop %v451
    %v473 = vsub.f32 %v472, %v427
    %v474 = vmul.f32 %v471, %v473
    %v475 = vadd.f32 %v427, %v474
    %v477 = vsel %vm140, %v475, 0
    %479 = vmatpush.msra.mxu0 0.0
    %480 = vmatpush.msra.mxu0 0.0
    %481 = vmatpush.msra.mxu0 0.0
    %482 = vmatpush.msra.mxu0 0.0
    %483 = vmatpush.msra.mxu0 0.0
    %484 = vmatpush.msra.mxu0 0.0
    %485 = vmatpush.msra.mxu0 0.0
    %486 = vmatpush.msra.mxu0 0.0
    %487 = vmatpush.msra.mxu0 0.0
    %488 = vmatpush.msra.mxu0 0.0
    %489 = vmatpush.msra.mxu0 0.0
    %490 = vmatpush.msra.mxu0 0.0
    %491 = vmatpush.msra.mxu0 %v33
    %492 = vmatpush.msra.mxu0 %v32
    %493 = vmatpush.msra.mxu0 %v31
    %494 = vmatpush.msra.mxu0 %v30
    %495 = vmatmul.f32.gmra.mxu0 %v477
    %v496 = vpop.f32.mrf.mxu0
    %v497 = vadd.f32 0.0, %v496
    %498 = vdwg.mxu0
    %v499 = vadd.f32 %v138, %v497
    %v500 = vxor.u32 %v499, 2147483648
    %v501 = vmul.f32 %v500, 1.442695
    %v502 = vpow.pop %v501
    %v503 = vadd.f32 %v502, 1.0
    %v504 = vrcp.pop %v503
    %v505 = vmul.f32 %v503, %v504
    %v506 = vsub.f32 1.0, %v505
    %v507 = vmul.f32 %v504, %v506
    %v508 = vadd.f32 %v504, %v507
    %vm509 = vweird.f32 %v503
    %vm510 = vweird.f32 %v504
    %vm511 = vmor %vm509, %vm510
    %v512 = vsel %vm511, %v504, %v508
    %v513 = vand.u32 2147483647, %v503
    %vm514 = vcmp.eq.f32.partialorder %v513, 8.507059e+37
    %v515 = vand.u32 %v503, 2147483648
    %v516 = vor.u32 1.1754944e-38, %v515
    %v517 = vsel %vm514, %v516, %v512
    %v518 = vmul.f32 1.0, %v517
    %v519 = vmul.f32 %v518, 0.1
    %v520 = vtanh.pop %v499
    %v521 = vsub.f32 %v520, %v475
    %v522 = vmul.f32 %v519, %v521
    %v523 = vadd.f32 %v475, %v522
    %v524 = vperm.slane %v62, 0
    %v526 = vsel %vm140, %v523, 0
    %528 = vmatpush.msra.mxu0 0.0
    %529 = vmatpush.msra.mxu0 0.0
    %530 = vmatpush.msra.mxu0 0.0
    %531 = vmatpush.msra.mxu0 0.0
    %532 = vmatpush.msra.mxu0 0.0
    %533 = vmatpush.msra.mxu0 0.0
    %534 = vmatpush.msra.mxu0 0.0
    %535 = vmatpush.msra.mxu0 0.0
    %536 = vmatpush.msra.mxu0 0.0
    %537 = vmatpush.msra.mxu0 0.0
    %538 = vmatpush.msra.mxu0 0.0
    %539 = vmatpush.msra.mxu0 0.0
    %540 = vmatpush.msra.mxu0 %v37
    %541 = vmatpush.msra.mxu0 %v36
    %542 = vmatpush.msra.mxu0 %v35
    %543 = vmatpush.msra.mxu0 %v34
    %544 = vmatmul.f32.gmra.mxu0 %v526
    %v545 = vpop.f32.mrf.mxu0
    %v546 = vadd.f32 %v524, %v545
    %547 = vdwg.mxu0
    %v548 = vmax.f32 %v546, 0.0
    %v549 = vperm.slane %v63, 0
    %551 = vrot.lane.b32.xlu0 %v548, 120
    %v552 = vpop.permute.xlu0 %551
    %vm553 = vcmask 850944
    %v554 = vsel %vm553, %v552, 0
    %556 = vmatpush.msra.mxu0 0.0
    %557 = vmatpush.msra.mxu0 0.0
    %558 = vmatpush.msra.mxu0 0.0
    %559 = vmatpush.msra.mxu0 %v50
    %560 = vmatpush.msra.mxu0 %v49
    %561 = vmatpush.msra.mxu0 %v48
    %562 = vmatpush.msra.mxu0 %v47
    %563 = vmatpush.msra.mxu0 %v46
    %564 = vmatpush.msra.mxu0 %v45
    %565 = vmatpush.msra.mxu0 %v44
    %566 = vmatpush.msra.mxu0 %v43
    %567 = vmatpush.msra.mxu0 %v42
    %568 = vmatpush.msra.mxu0 %v41
    %569 = vmatpush.msra.mxu0 %v40
    %570 = vmatpush.msra.mxu0 %v39
    %571 = vmatpush.msra.mxu0 %v38
    %572 = vmatmul.f32.gmra.mxu0 %v554
    %v573 = vpop.f32.mrf.mxu0
    %v574 = vadd.f32 %v549, %v573
    %575 = vdwg.mxu0
    %v576 = vxor.u32 %v574, 2147483648
    %v577 = vmul.f32 %v576, 1.442695
    %v578 = vpow.pop %v577
    %v579 = vadd.f32 %v578, 1.0
    %v580 = vrcp.pop %v579
    %v581 = vmul.f32 %v579, %v580
    %v582 = vsub.f32 1.0, %v581
    %v583 = vmul.f32 %v580, %v582
    %v584 = vadd.f32 %v580, %v583
    %vm585 = vweird.f32 %v579
    %vm586 = vweird.f32 %v580
    %vm587 = vmor %vm585, %vm586
    %v588 = vsel %vm587, %v580, %v584
    %v589 = vand.u32 2147483647, %v579
    %vm590 = vcmp.eq.f32.partialorder %v589, 8.507059e+37
    %v591 = vand.u32 %v579, 2147483648
    %v592 = vor.u32 1.1754944e-38, %v591
    %v593 = vsel %vm590, %v592, %v588
    %v594 = vmul.f32 1.0, %v593
    %v595 = vmax.f32 %v574, 0.0
    %v596 = vperm.slane %v64, 0
    %598 = vrot.lane.b32.xlu0 %v595, 127
    %v599 = vpop.permute.xlu0 %598
    %vm600 = vcmask 654336
    %v601 = vsel %vm600, %v599, 0
    %603 = vmatpush.msra.mxu0 0.0
    %604 = vmatpush.msra.mxu0 0.0
    %605 = vmatpush.msra.mxu0 0.0
    %606 = vmatpush.msra.mxu0 0.0
    %607 = vmatpush.msra.mxu0 0.0
    %608 = vmatpush.msra.mxu0 0.0
    %609 = vmatpush.msra.mxu0 %v60
    %610 = vmatpush.msra.mxu0 %v59
    %611 = vmatpush.msra.mxu0 %v58
    %612 = vmatpush.msra.mxu0 %v57
    %613 = vmatpush.msra.mxu0 %v56
    %614 = vmatpush.msra.mxu0 %v55
    %615 = vmatpush.msra.mxu0 %v54
    %616 = vmatpush.msra.mxu0 %v53
    %617 = vmatpush.msra.mxu0 %v52
    %618 = vmatpush.msra.mxu0 %v51
    %619 = vmatmul.f32.gmra.mxu0 %v601
    %v620 = vpop.f32.mrf.mxu0
    %v621 = vadd.f32 %v596, %v620
    %622 = vdwg.mxu0
    %vm623 = vcmask 64512
    %v624 = vsel %vm623, %v546, -inf
    %625 = vmax.xlane.f32.xlu0 %v624
    %v626 = vpop.xlane.xlu0 %625
    %v627 = vsub.f32 %v546, %v626
    %v628 = vmul.f32 %v627, 1.442695
    %v629 = vpow.pop %v628
    %v630 = vsel %vm623, %v629, 0.0
    %631 = vadd.xlane.f32.xlu0 %v630
    %v632 = vpop.xlane.xlu0 %631
    %v633 = vrcp.pop %v632
    %v634 = vmul.f32 %v632, %v633
    %v635 = vsub.f32 1.0, %v634
    %v636 = vmul.f32 %v633, %v635
    %v637 = vadd.f32 %v633, %v636
    %vm638 = vweird.f32 %v632
    %vm639 = vweird.f32 %v633
    %vm640 = vmor %vm638, %vm639
    %v641 = vsel %vm640, %v633, %v637
    %v642 = vand.u32 2147483647, %v632
    %vm643 = vcmp.eq.f32.partialorder %v642, 8.507059e+37
    %v644 = vand.u32 %v632, 2147483648
    %v645 = vor.u32 1.1754944e-38, %v644
    %v646 = vsel %vm643, %v645, %v641
    %v647 = vmul.f32 %v629, %v646
    %v648 = vsel %vm623, %v647, -inf
    %649 = vmax.xlane.f32.xlu0 %v648
    %v650 = vpop.xlane.xlu0 %649
    %v651 = vadd.f32 %v647, 1e-09
    %v652 = vlog2.pop %v651
    %v653 = vmul.f32 %v652, 0.6931472
    %v654 = vmul.f32 %v647, %v653
    %v655 = vsel %vm623, %v654, 0.0
    %656 = vadd.xlane.f32.xlu0 %v655
    %v657 = vpop.xlane.xlu0 %656
    %v658 = vsub.f32 0.0, %v657
    %v659 = vmul.f32 %v658, 0.48089835
    %v660 = vmax.f32 %v659, 0.0
    %v661 = vmin.f32 %v660, 1.0
    %vm662 = vcmask 23552
    %v663 = vsel %vm662, %v621, -inf
    %664 = vmax.xlane.f32.xlu0 %v663
    %v665 = vpop.xlane.xlu0 %664
    %v666 = vsub.f32 %v621, %v665
    %v667 = vmul.f32 %v666, 1.442695
    %v668 = vpow.pop %v667
    %v669 = vsel %vm662, %v668, 0.0
    %670 = vadd.xlane.f32.xlu0 %v669
    %v671 = vpop.xlane.xlu0 %670
    %v672 = vrcp.pop %v671
    %v673 = vmul.f32 %v671, %v672
    %v674 = vsub.f32 1.0, %v673
    %v675 = vmul.f32 %v672, %v674
    %v676 = vadd.f32 %v672, %v675
    %vm677 = vweird.f32 %v671
    %vm678 = vweird.f32 %v672
    %vm679 = vmor %vm677, %vm678
    %v680 = vsel %vm679, %v672, %v676
    %v681 = vand.u32 2147483647, %v671
    %vm682 = vcmp.eq.f32.partialorder %v681, 8.507059e+37
    %v683 = vand.u32 %v671, 2147483648
    %v684 = vor.u32 1.1754944e-38, %v683
    %v685 = vsel %vm682, %v684, %v680
    %v686 = vmul.f32 %v668, %v685
    %687 = vst [vmem:[#allocation5] sm:$0xff] 0.0
    %688 = vst.msk [vmem:[#allocation5] sm:$0xff] %vm623, %v546
    %vm689 = vcmask 72768
    %690 = vst.msk [vmem:[#allocation5] sm:$0xff] %vm689, %v650
    %vm691 = vcmask 80968
    %692 = vst.msk [vmem:[#allocation5] sm:$0xff] %vm691, %v661
    %694 = vrot.lane.b32.xlu0 %v594, 10
    %v695 = vpop.permute.xlu0 %694
    %vm697 = vcmask 89168
    %698 = vst.msk [vmem:[#allocation5] sm:$0xff] %vm697, %v695
    %700 = vrot.lane.b32.xlu0 %v621, 11
    %v701 = vpop.permute.xlu0 %700
    %vm703 = vcmask 113752
    %704 = vst.msk [vmem:[#allocation5] sm:$0xff] %vm703, %v701
    %706 = vrot.lane.b32.xlu0 %v686, 14
    %v707 = vpop.permute.xlu0 %706
    %vm709 = vcmask 138352
    %710 = vst.msk [vmem:[#allocation5] sm:$0xff] %vm709, %v707
    %711 = vrot.lane.b32.xlu0 %v548, 41
    %v712 = vpop.permute.xlu0 %711
    %vm714 = vcmask 203912
    %715 = vst.msk [vmem:[#allocation5] sm:$0xff] %vm714, %v712
    %716 = vrot.lane.b32.xlu0 %v523, 25
    %v717 = vpop.permute.xlu0 %716
    %vm719 = vcmask 466120
    %720 = vst.msk [vmem:[#allocation5] sm:$0xff] %vm719, %v717
    %721 = vrot.lane.b32.xlu0 %v621, 54
    %v722 = vpop.permute.xlu0 %721
    %vm724 = vcmask 728520
    %725 = vst.msk [vmem:[#allocation5] sm:$0xff] %vm724, %v722
    // Predicated region
    $region14: #{_run_kernel.1} parent=1 // pred_check
      _
    $region15: #{_run_kernel.1} parent=1 // pred_check_branch
      %727 = sbr.rel (0) target = $region17
    $region16: #{_run_kernel.1} parent=1 // pred_region
      %729 = vsyncadd [#allocation4], 0
      %s731 = sshll.u32 [#allocation5], 4
      %s732 = int_to_ptr.vmem [resolvable:$true] %s731
      %s733 = sshll.u32 %s2, 4
      %s734 = int_to_ptr.hbm [resolvable:$true] %s733
      %736 = dma.vmem_to_hbm [thread:$0]  %s732, 128, %s734, [#allocation4]
    $region17: #{_run_kernel.1} parent=1 // pred_fallthru
      _
    // Predicated region
    $region18: #{_run_kernel.1} parent=1 // pred_check
      _
    $region19: #{_run_kernel.1} parent=1 // pred_check_branch
      %738 = sbr.rel (0) target = $region21
    $region20: #{_run_kernel.1} parent=1 // pred_region
      %740 = dma.done [#allocation4], 128
    $region21: #{_run_kernel.1} parent=1 // pred_fallthru
      _
    %741 = vsyncpa [#allocation3], 1
    %742 = vsyncpa [#allocation4], 1

</llo_original>
